<compile_context>
chip_gen: v5e
topology: v5e:2x2
jax: 0.10.0
libtpu: 0.0.40
codegen_flags: <defaults>
</compile_context>

<pallas_src>
import functools

import jax
import jax.numpy as jnp
from jax.experimental import pallas as pl
from jax.experimental.pallas import tpu as pltpu


def class_embedding_kernel(x_ref, w1_ref, b1_ref, w2_ref, b2_ref, o_ref):
    # Linear1: [TM, C] @ [C, Dp] on the MXU, f32 accumulation, + bias (VPU).
    h = jnp.dot(x_ref[...], w1_ref[...], preferred_element_type=jnp.float32)
    h = h + b1_ref[...]
    # SiLU = h * sigmoid(h).  Transcendental goes to the EUP slot.
    # (If a bundle dump ever shows EUP as the binding unit, switch to
    #  h * pl.reciprocal(1 + jnp.exp(-h), approx=True).)
    h = h * jax.nn.sigmoid(h)
    # Linear2: [TM, Dp] @ [Dp, Dp] + b2.  Cast h to the weight dtype so a bf16
    # model gets a native bf16 MXU pass (f32 path: the cast is a no-op).
    y = jnp.dot(h.astype(w2_ref.dtype), w2_ref[...],
                preferred_element_type=jnp.float32)
    o_ref[...] = (y + b2_ref[...]).astype(o_ref.dtype)


def _round_up(n, m):
    return ((n + m - 1) // m) * m


def _vmem_capacity_bytes():
    try:
        return int(pltpu.get_tpu_info().vmem_capacity_bytes)
    except Exception:
        return 64 * 1024 * 1024  # conservative fallback (v7x per-TC VMEM)


def prepare_class_embedding_params(w1, b1, w2, b2):
    """Pad the parameters to lane-dense (multiple-of-128) embed dims.

    Call this ONCE (outside the per-step forward) and reuse the result; the
    padding is pure XLA and should not sit on the hot path.
    Returns (w1p, b1p, w2p, b2p) with shapes (C, Dp), (1, Dp), (Dp, Dp), (1, Dp).
    """
    C, D = w1.shape
    dtype = w1.dtype
    Dp = _round_up(D, 128)
    if Dp == D:
        w1p = w1
        w2p = w2
        b1p = jnp.reshape(b1, (1, D))
        b2p = jnp.reshape(b2, (1, D))
    else:
        w1p = jnp.zeros((C, Dp), dtype).at[:, :D].set(w1)
        b1p = jnp.zeros((1, Dp), dtype).at[:, :D].set(jnp.reshape(b1, (1, -1)))
        w2p = jnp.zeros((Dp, Dp), dtype).at[:D, :D].set(w2)
        b2p = jnp.zeros((1, Dp), dtype).at[:, :D].set(jnp.reshape(b2, (1, -1)))
    return w1p, b1p, w2p, b2p


def class_embedding_apply(x, w1p, b1p, w2p, b2p, *, out_dim, block_rows=1024):
    """Forward pass with pre-padded params. x: [B, C] -> [B, out_dim]."""
    B, C = x.shape
    Dp = w1p.shape[1]
    D = out_dim
    dtype = x.dtype
    itemsize = jnp.dtype(dtype).itemsize

    # ---- VMEM sizing (per-generation, not hard-coded) ----------------------
    capacity = _vmem_capacity_bytes()
    budget = int(capacity * 0.6)

    # Weights/biases are single-buffered (pl.Buffered(1)).
    weight_bytes = (C * Dp + Dp + Dp * Dp + Dp) * itemsize
    # Per row: double-buffered x tile, double-buffered out tile, f32 h, f32
    # second-dot result, and the cast copy of h fed to the second matmul.
    act_bytes_per_row = (2 * C * itemsize
                         + 2 * Dp * itemsize
                         + Dp * (4 + 4 + itemsize))

    max_rows = (budget - weight_bytes) // act_bytes_per_row
    if max_rows < 256:
        # TODO(synk): when the resident weights exceed the VMEM budget, add a
        # second grid axis over Dp (N-tiling of w2/b2/output) instead of
        # shrinking the row tile; for now keep the row tile large.
        max_rows = 256
    TM = min(block_rows, _round_up(B, 8), (max_rows // 8) * 8)
    TM = max(TM, 8)
    grid = (pl.cdiv(B, TM),)

    needed = weight_bytes + TM * act_bytes_per_row
    vmem_limit = int(min(capacity, max(needed + (8 << 20), 32 << 20)))

    out = pl.pallas_call(
        class_embedding_kernel,
        out_shape=jax.ShapeDtypeStruct((B, Dp), dtype),
        grid_spec=pltpu.PrefetchScalarGridSpec(
            num_scalar_prefetch=0,
            grid=grid,
            in_specs=[
                # streamed activations (unpadded; full-extent last dim)
                pl.BlockSpec((TM, C), lambda i: (i, 0)),
                # weights / biases: constant index_map + single resident buffer
                pl.BlockSpec((C, Dp), lambda i: (0, 0),
                             pipeline_mode=pl.Buffered(1)),
                pl.BlockSpec((1, Dp), lambda i: (0, 0),
                             pipeline_mode=pl.Buffered(1)),
                pl.BlockSpec((Dp, Dp), lambda i: (0, 0),
                             pipeline_mode=pl.Buffered(1)),
                pl.BlockSpec((1, Dp), lambda i: (0, 0),
                             pipeline_mode=pl.Buffered(1)),
            ],
            out_specs=pl.BlockSpec((TM, Dp), lambda i: (i, 0)),
        ),
        compiler_params=pltpu.CompilerParams(
            dimension_semantics=(pltpu.PARALLEL,),
            vmem_limit_bytes=vmem_limit,
        ),
    )(x, w1p, b1p, w2p, b2p)

    if Dp == D:
        return out            # lane-aligned embed dim: no extra output pass
    return out[:, :D]


def class_embedding(x, w1, b1, w2, b2, *, block_rows=1024):
    """Convenience one-shot wrapper (prepares params per call).

    For repeated forwards, hoist prepare_class_embedding_params() out of the
    hot path and call class_embedding_apply() directly.
    """
    D = w1.shape[1]
    params = prepare_class_embedding_params(w1, b1, w2, b2)
    return class_embedding_apply(x, *params, out_dim=D, block_rows=block_rows)


def reference(x, w1, b1, w2, b2):
    h = jnp.dot(x, w1, preferred_element_type=jnp.float32) + jnp.reshape(b1, (1, -1))
    h = h * jax.nn.sigmoid(h)
    return jnp.dot(h, w2, preferred_element_type=jnp.float32) + jnp.reshape(b2, (1, -1))


if __name__ == "__main__":
    num_classes = 16
    embed_dim = 32
    batch = 8

    key = jax.random.PRNGKey(0)
    kx, kw1, kb1, kw2, kb2 = jax.random.split(key, 5)

    # Deterministic synthetic parameters (shapes follow nn.Linear in __init__).
    x = jax.random.normal(kx, (batch, num_classes), dtype=jnp.float32)
    w1 = jax.random.normal(kw1, (num_classes, embed_dim), dtype=jnp.float32) * 0.1
    b1 = jax.random.normal(kb1, (1, embed_dim), dtype=jnp.float32) * 0.1
    w2 = jax.random.normal(kw2, (embed_dim, embed_dim), dtype=jnp.float32) * 0.1
    b2 = jax.random.normal(kb2, (1, embed_dim), dtype=jnp.float32) * 0.1

    # Pad the parameters once (outside the hot path), then jit the apply fn.
    params = prepare_class_embedding_params(w1, b1, w2, b2)
    apply_fn = jax.jit(functools.partial(class_embedding_apply, out_dim=embed_dim))

    out = apply_fn(x, *params)
    jax.block_until_ready(out)

    ref = reference(x, w1, b1, w2, b2)
    assert out.shape == (batch, embed_dim)
    assert jnp.allclose(out, ref.astype(out.dtype), atol=1e-4, rtol=1e-4)

    print("KERNEL_OK")
</pallas_src>

<mosaic_0001>
module attributes {stable_mosaic.version = 11 : i64} {
  func.func @class_embedding_kernel(%arg0: i32, %arg1: memref<8x16xf32, #tpu.memory_space<vmem>>, %arg2: memref<16x128xf32, #tpu.memory_space<vmem>>, %arg3: memref<1x128xf32, #tpu.memory_space<vmem>>, %arg4: memref<128x128xf32, #tpu.memory_space<vmem>>, %arg5: memref<1x128xf32, #tpu.memory_space<vmem>>, %arg6: memref<8x128xf32, #tpu.memory_space<vmem>>) attributes {dimension_semantics = [#tpu.dimension_semantics<parallel>], iteration_bounds = array<i64: 1>, scalar_prefetch = 0 : i64, scratch_operands = 0 : i64, tpu.core_type = #tpu.core_type<tc>, window_params = [{transform_indices = @transform_0, window_bounds = array<i64: 8, 16>}, {pipeline_mode = #tpu.pipeline_mode<synchronous>, transform_indices = @transform_1, window_bounds = array<i64: 16, 128>}, {pipeline_mode = #tpu.pipeline_mode<synchronous>, transform_indices = @transform_2, window_bounds = array<i64: 1, 128>}, {pipeline_mode = #tpu.pipeline_mode<synchronous>, transform_indices = @transform_3, window_bounds = array<i64: 128, 128>}, {pipeline_mode = #tpu.pipeline_mode<synchronous>, transform_indices = @transform_4, window_bounds = array<i64: 1, 128>}, {transform_indices = @transform_5, window_bounds = array<i64: 8, 128>}]} {
    %c0 = arith.constant 0 : index
    %c0_0 = arith.constant 0 : index
    %0 = vector.load %arg1[%c0, %c0_0] : memref<8x16xf32, #tpu.memory_space<vmem>>, vector<8x16xf32>
    %c0_1 = arith.constant 0 : index
    %c0_2 = arith.constant 0 : index
    %1 = vector.load %arg2[%c0_1, %c0_2] : memref<16x128xf32, #tpu.memory_space<vmem>>, vector<16x128xf32>
    %cst = arith.constant dense<0.000000e+00> : vector<8x128xf32>
    %2 = tpu.matmul %0, %1, %cst {dimension_numbers = #tpu.dot_dimension_numbers<[1], [0], [0], [1], [0, 0, 1, 1], [], []>} : vector<8x16xf32>, vector<16x128xf32>, vector<8x128xf32> -> vector<8x128xf32>
    %c0_3 = arith.constant 0 : index
    %c0_4 = arith.constant 0 : index
    %3 = vector.load %arg3[%c0_3, %c0_4] : memref<1x128xf32, #tpu.memory_space<vmem>>, vector<1x128xf32>
    %4 = vector.broadcast %3 : vector<1x128xf32> to vector<8x128xf32>
    %5 = arith.addf %2, %4 : vector<8x128xf32>
    %6 = arith.negf %5 : vector<8x128xf32>
    %7 = math.exp %6 : vector<8x128xf32>
    %cst_5 = arith.constant 1.000000e+00 : f32
    %8 = vector.broadcast %cst_5 : f32 to vector<8x128xf32>
    %9 = arith.addf %8, %7 : vector<8x128xf32>
    %10 = arith.divf %8, %9 : vector<8x128xf32>
    %11 = arith.mulf %5, %10 : vector<8x128xf32>
    %c0_6 = arith.constant 0 : index
    %c0_7 = arith.constant 0 : index
    %12 = vector.load %arg4[%c0_6, %c0_7] : memref<128x128xf32, #tpu.memory_space<vmem>>, vector<128x128xf32>
    %cst_8 = arith.constant dense<0.000000e+00> : vector<8x128xf32>
    %13 = tpu.matmul %11, %12, %cst_8 {dimension_numbers = #tpu.dot_dimension_numbers<[1], [0], [0], [1], [0, 0, 1, 1], [], []>} : vector<8x128xf32>, vector<128x128xf32>, vector<8x128xf32> -> vector<8x128xf32>
    %c0_9 = arith.constant 0 : index
    %c0_10 = arith.constant 0 : index
    %14 = vector.load %arg5[%c0_9, %c0_10] : memref<1x128xf32, #tpu.memory_space<vmem>>, vector<1x128xf32>
    %15 = vector.broadcast %14 : vector<1x128xf32> to vector<8x128xf32>
    %16 = arith.addf %13, %15 : vector<8x128xf32>
    %c0_11 = arith.constant 0 : index
    %c0_12 = arith.constant 0 : index
    %17 = vector.load %arg6[%c0_11, %c0_12] : memref<8x128xf32, #tpu.memory_space<vmem>>, vector<8x128xf32>
    tpu.vector_store %arg6[%c0_11, %c0_12], %16 {strides = array<i32>} : memref<8x128xf32, #tpu.memory_space<vmem>>, vector<8x128xf32>,
    return
  }
  func.func @transform_0(%arg0: i32) -> (i32, i32) {
    %c0_i32 = arith.constant 0 : i32
    %c0_i32_0 = arith.constant 0 : i32
    return %arg0, %c0_i32 : i32, i32
  }
  func.func @transform_1(%arg0: i32) -> (i32, i32) {
    %c0_i32 = arith.constant 0 : i32
    %c0_i32_0 = arith.constant 0 : i32
    %c0_i32_1 = arith.constant 0 : i32
    return %c0_i32, %c0_i32_0 : i32, i32
  }
  func.func @transform_2(%arg0: i32) -> (i32, i32) {
    %c0_i32 = arith.constant 0 : i32
    %c0_i32_0 = arith.constant 0 : i32
    %c0_i32_1 = arith.constant 0 : i32
    return %c0_i32, %c0_i32_0 : i32, i32
  }
  func.func @transform_3(%arg0: i32) -> (i32, i32) {
    %c0_i32 = arith.constant 0 : i32
    %c0_i32_0 = arith.constant 0 : i32
    %c0_i32_1 = arith.constant 0 : i32
    return %c0_i32, %c0_i32_0 : i32, i32
  }
  func.func @transform_4(%arg0: i32) -> (i32, i32) {
    %c0_i32 = arith.constant 0 : i32
    %c0_i32_0 = arith.constant 0 : i32
    %c0_i32_1 = arith.constant 0 : i32
    return %c0_i32, %c0_i32_0 : i32, i32
  }
  func.func @transform_5(%arg0: i32) -> (i32, i32) {
    %c0_i32 = arith.constant 0 : i32
    %c0_i32_0 = arith.constant 0 : i32
    return %arg0, %c0_i32 : i32, i32
  }
}

</mosaic_0001>

<llo_original>
// kernel: class_embedding_apply.1
$region0: #{class_embedding_apply.1}
  #allocation0 [shape = 'u32[]', space=smem, size = 0x4, offset = 0x4, fixed_abs, tag = 'smem constant byte address 0x4 - core index']
  #allocation1 [shape = 'u32[72,128]{1,0:T(1,128)}', space=vmem, size = 0x9000, scoped, tag = 'internal scratch']
  %s0 = inlined_call_operand.hbm [shape: f32[8,16], index: 0, kind: input, shape index: {}]
  %s1 = inlined_call_operand.hbm [shape: f32[16,128], index: 1, kind: input, shape index: {}]
  %s2 = inlined_call_operand.vmem [shape: f32[1,128], index: 2, kind: input, shape index: {}]
  %s3 = inlined_call_operand.hbm [shape: f32[128,128], index: 3, kind: input, shape index: {}]
  %s4 = inlined_call_operand.vmem [shape: f32[1,128], index: 4, kind: input, shape index: {}]
  %s5 = inlined_call_operand.hbm [shape: f32[8,128], index: 5, kind: output, shape index: {}]
  %s6 = sld [smem:[#allocation0]]
  $region42: #{class_embedding_apply.1} parent=0
    _
  %s8 = ssub.s32 1, %s6
  %s9 = scalar_select 0, %s8, %s6
  $region1: #{class_embedding_apply.1} parent=0
    #allocation2 [shape = 'u8[4096]{0}', space=vmem, size = 0x1000, scoped, tag = 'input window, operand 0, single buffered']
    #allocation3 [shape = 's32[1]{0}', space=sflag, size = 0x4, scoped, tag = 'scoped memory for class_embedding_apply.1']
    #allocation4 [shape = 's32[1]{0}', space=sflag, size = 0x4, scoped, tag = 'scoped memory for class_embedding_apply.1']
    #allocation5 [shape = 'u8[8192]{0}', space=vmem, size = 0x2000, scoped, tag = 'input window, operand 1, single buffered']
    #allocation6 [shape = 's32[1]{0}', space=sflag, size = 0x4, scoped, tag = 'scoped memory for class_embedding_apply.1']
    #allocation7 [shape = 'u8[65536]{0}', space=vmem, size = 0x10000, scoped, tag = 'input window, operand 3, single buffered']
    #allocation8 [shape = 'u8[4096]{0}', space=vmem, size = 0x1000, scoped, tag = 'output window, operand 0, single buffered']
    %10 = vsyncpa [#allocation3], 0
    %11 = vsyncpa [#allocation6], 0
    %12 = vsyncpa [#allocation4], 0
    // Predicated region
    $region2: #{class_embedding_apply.1} parent=1 // pred_check
      _
    $region3: #{class_embedding_apply.1} parent=1 // pred_check_branch
      %14 = sbr.rel (0) target = $region5
    $region4: #{class_embedding_apply.1} parent=1 // pred_region
      %16 = vsyncadd [#allocation3], 0
      %s18 = sshll.u32 %s0, 4
      %s19 = int_to_ptr.hbm [resolvable:$true] %s18
      %s20 = sshll.u32 [#allocation2], 4
      %s21 = int_to_ptr.vmem [resolvable:$true] %s20
      %23 = dma.hbm_to_vmem [thread:$0]  %s19, 128, %s21, [#allocation3]
    $region5: #{class_embedding_apply.1} parent=1 // pred_fallthru
      _
    // Predicated region
    $region6: #{class_embedding_apply.1} parent=1 // pred_check
      _
    $region7: #{class_embedding_apply.1} parent=1 // pred_check_branch
      %25 = sbr.rel (0) target = $region9
    $region8: #{class_embedding_apply.1} parent=1 // pred_region
      %27 = vsyncadd [#allocation6], 0
      %s28 = sshll.u32 %s1, 4
      %s29 = int_to_ptr.hbm [resolvable:$true] %s28
      %s30 = sshll.u32 [#allocation5], 4
      %s31 = int_to_ptr.vmem [resolvable:$true] %s30
      %36 = dma.hbm_to_vmem [thread:$0]  %s29, 256, %s31, [#allocation6], 128, 128, 8
    $region9: #{class_embedding_apply.1} parent=1 // pred_fallthru
      _
    // Predicated region
    $region10: #{class_embedding_apply.1} parent=1 // pred_check
      _
    $region11: #{class_embedding_apply.1} parent=1 // pred_check_branch
      %38 = sbr.rel (0) target = $region13
    $region12: #{class_embedding_apply.1} parent=1 // pred_region
      _
    $region13: #{class_embedding_apply.1} parent=1 // pred_fallthru
      _
    // Predicated region
    $region14: #{class_embedding_apply.1} parent=1 // pred_check
      _
    $region15: #{class_embedding_apply.1} parent=1 // pred_check_branch
      %40 = sbr.rel (0) target = $region17
    $region16: #{class_embedding_apply.1} parent=1 // pred_region
      %42 = vsyncadd [#allocation6], 0
      %s43 = sshll.u32 %s3, 4
      %s44 = int_to_ptr.hbm [resolvable:$true] %s43
      %s45 = sshll.u32 [#allocation7], 4
      %s46 = int_to_ptr.vmem [resolvable:$true] %s45
      %51 = dma.hbm_to_vmem [thread:$0]  %s44, 2048, %s46, [#allocation6], 128, 128, 8
    $region17: #{class_embedding_apply.1} parent=1 // pred_fallthru
      _
    // Predicated region
    $region18: #{class_embedding_apply.1} parent=1 // pred_check
      _
    $region19: #{class_embedding_apply.1} parent=1 // pred_check_branch
      %53 = sbr.rel (0) target = $region21
    $region20: #{class_embedding_apply.1} parent=1 // pred_region
      _
    $region21: #{class_embedding_apply.1} parent=1 // pred_fallthru
      _
    // Predicated region
    $region22: #{class_embedding_apply.1} parent=1 // pred_check
      _
    $region23: #{class_embedding_apply.1} parent=1 // pred_check_branch
      %55 = sbr.rel (0) target = $region25
    $region24: #{class_embedding_apply.1} parent=1 // pred_region
      %57 = dma.done [#allocation3], 128
    $region25: #{class_embedding_apply.1} parent=1 // pred_fallthru
      _
    // Predicated region
    $region26: #{class_embedding_apply.1} parent=1 // pred_check
      _
    $region27: #{class_embedding_apply.1} parent=1 // pred_check_branch
      %59 = sbr.rel (0) target = $region29
    $region28: #{class_embedding_apply.1} parent=1 // pred_region
      %61 = dma.done [#allocation6], 256
    $region29: #{class_embedding_apply.1} parent=1 // pred_fallthru
      _
    // Predicated region
    $region30: #{class_embedding_apply.1} parent=1 // pred_check
      _
    $region31: #{class_embedding_apply.1} parent=1 // pred_check_branch
      %63 = sbr.rel (0) target = $region33
    $region32: #{class_embedding_apply.1} parent=1 // pred_region
      %65 = dma.done [#allocation6], 2048
    $region33: #{class_embedding_apply.1} parent=1 // pred_fallthru
      _
    %v66 = vld [vmem:[#allocation2] sm:$0xff]
    %v67 = vld [vmem:[#allocation5] sm:$0xff]
    %v68 = vld [vmem:[#allocation5 + $0x8] sm:$0xff]
    %v69 = vld [vmem:[%s2] sm:$0x1]
    %v71 = vperm.slane %v69, 0
    %vm73 = vcmask 130048
    %v75 = vsel %vm73, %v66, 0
    %77 = vmatpush.msra.mxu0 0.0
    %78 = vmatpush.msra.mxu0 0.0
    %79 = vmatpush.msra.mxu0 0.0
    %80 = vmatpush.msra.mxu0 0.0
    %81 = vmatpush.msra.mxu0 0.0
    %82 = vmatpush.msra.mxu0 0.0
    %83 = vmatpush.msra.mxu0 0.0
    %84 = vmatpush.msra.mxu0 0.0
    %85 = vmatpush.msra.mxu0 0.0
    %86 = vmatpush.msra.mxu0 0.0
    %87 = vmatpush.msra.mxu0 0.0
    %88 = vmatpush.msra.mxu0 0.0
    %89 = vmatpush.msra.mxu0 0.0
    %90 = vmatpush.msra.mxu0 0.0
    %91 = vmatpush.msra.mxu0 %v68
    %92 = vmatpush.msra.mxu0 %v67
    %93 = vmatmul.f32.gmra.mxu0 %v75
    %v94 = vpop.f32.mrf.mxu0
    %v95 = vadd.f32 %v71, %v94
    %96 = vdwg.mxu0
    %v97 = vxor.u32 %v95, 2147483648
    %v98 = vmul.f32 %v97, 1.442695
    %v99 = vpow.pop %v98
    %v100 = vadd.f32 %v99, 1.0
    %v101 = vrcp.pop %v100
    %v102 = vmul.f32 %v100, %v101
    %v103 = vsub.f32 1.0, %v102
    %v104 = vmul.f32 %v101, %v103
    %v105 = vadd.f32 %v101, %v104
    %vm106 = vweird.f32 %v100
    %vm107 = vweird.f32 %v101
    %vm108 = vmor %vm106, %vm107
    %v109 = vsel %vm108, %v101, %v105
    %v110 = vand.u32 2147483647, %v100
    %vm111 = vcmp.eq.f32.partialorder %v110, 8.507059e+37
    %v112 = vand.u32 %v100, 2147483648
    %v113 = vor.u32 1.1754944e-38, %v112
    %v114 = vsel %vm111, %v113, %v109
    %v115 = vmul.f32 1.0, %v114
    %v116 = vmul.f32 %v95, %v115
    %v117 = vld [vmem:[#allocation7] sm:$0xff]
    %v118 = vld [vmem:[#allocation7 + $0x8] sm:$0xff]
    %v119 = vld [vmem:[#allocation7 + $0x10] sm:$0xff]
    %v120 = vld [vmem:[#allocation7 + $0x18] sm:$0xff]
    %v121 = vld [vmem:[#allocation7 + $0x20] sm:$0xff]
    %v122 = vld [vmem:[#allocation7 + $0x28] sm:$0xff]
    %v123 = vld [vmem:[#allocation7 + $0x30] sm:$0xff]
    %v124 = vld [vmem:[#allocation7 + $0x38] sm:$0xff]
    %v125 = vld [vmem:[#allocation7 + $0x40] sm:$0xff]
    %v126 = vld [vmem:[#allocation7 + $0x48] sm:$0xff]
    %v127 = vld [vmem:[#allocation7 + $0x50] sm:$0xff]
    %v128 = vld [vmem:[#allocation7 + $0x58] sm:$0xff]
    %v129 = vld [vmem:[#allocation7 + $0x60] sm:$0xff]
    %v130 = vld [vmem:[#allocation7 + $0x68] sm:$0xff]
    %v131 = vld [vmem:[#allocation7 + $0x70] sm:$0xff]
    %v132 = vld [vmem:[#allocation7 + $0x78] sm:$0xff]
    %v133 = vld [vmem:[%s4] sm:$0x1]
    %v135 = vperm.slane %v133, 0
    %137 = vmatpush.msra.mxu0 %v132
    %138 = vmatpush.msra.mxu0 %v131
    %139 = vmatpush.msra.mxu0 %v130
    %140 = vmatpush.msra.mxu0 %v129
    %141 = vmatpush.msra.mxu0 %v128
    %142 = vmatpush.msra.mxu0 %v127
    %143 = vmatpush.msra.mxu0 %v126
    %144 = vmatpush.msra.mxu0 %v125
    %145 = vmatpush.msra.mxu0 %v124
    %146 = vmatpush.msra.mxu0 %v123
    %147 = vmatpush.msra.mxu0 %v122
    %148 = vmatpush.msra.mxu0 %v121
    %149 = vmatpush.msra.mxu0 %v120
    %150 = vmatpush.msra.mxu0 %v119
    %151 = vmatpush.msra.mxu0 %v118
    %152 = vmatpush.msra.mxu0 %v117
    %153 = vmatmul.f32.gmra.mxu0 %v116
    %v154 = vpop.f32.mrf.mxu0
    %v155 = vadd.f32 %v135, %v154
    %156 = vdwg.mxu0
    %157 = vst [vmem:[#allocation8] sm:$0xff] %v155
    // Predicated region
    $region34: #{class_embedding_apply.1} parent=1 // pred_check
      _
    $region35: #{class_embedding_apply.1} parent=1 // pred_check_branch
      %159 = sbr.rel (0) target = $region37
    $region36: #{class_embedding_apply.1} parent=1 // pred_region
      %161 = vsyncadd [#allocation4], 0
      %s163 = sshll.u32 [#allocation8], 4
      %s164 = int_to_ptr.vmem [resolvable:$true] %s163
      %s165 = sshll.u32 %s5, 4
      %s166 = int_to_ptr.hbm [resolvable:$true] %s165
      %168 = dma.vmem_to_hbm [thread:$0]  %s164, 128, %s166, [#allocation4]
    $region37: #{class_embedding_apply.1} parent=1 // pred_fallthru
      _
    // Predicated region
    $region38: #{class_embedding_apply.1} parent=1 // pred_check
      _
    $region39: #{class_embedding_apply.1} parent=1 // pred_check_branch
      %170 = sbr.rel (0) target = $region41
    $region40: #{class_embedding_apply.1} parent=1 // pred_region
      %172 = dma.done [#allocation4], 128
    $region41: #{class_embedding_apply.1} parent=1 // pred_fallthru
      _
    %173 = vsyncpa [#allocation3], 1
    %174 = vsyncpa [#allocation6], 1
    %175 = vsyncpa [#allocation4], 1

</llo_original>
